<compile_context>
chip_gen: v7x
topology: tpu7x:2x2x1
jax: 0.10.0
libtpu: 0.0.40
codegen_flags: <defaults>
</compile_context>

<pallas_src>
import functools

import jax
import jax.numpy as jnp
from jax import lax
from jax.experimental import pallas as pl
from jax.experimental.pallas import tpu as pltpu

KSIZE = 7
PAD = KSIZE // 2


def _spatial_attention_kernel(w_ref, b_ref, col_ref, x_ref, o_ref, *, H, W):
    # x_ref/o_ref: (1, C, H*W) block for one batch element (lanes = H*W).
    # w_ref:  (2, 49) f32 conv weights in VMEM, w_ref[ci, kh*7+kw].
    # b_ref:  (1,) f32 conv bias in SMEM.
    # col_ref: (1, H*W) int32 column index (flat_index % W).
    _, C, HW = x_ref.shape

    xs = x_ref[0]                                                # (C, HW)
    # --- channel pooling: whole-block reductions, f32 accumulation ---
    avg = jnp.sum(xs.astype(jnp.float32), axis=0, keepdims=True) * (1.0 / C)
    mx = jnp.max(xs, axis=0, keepdims=True).astype(jnp.float32)
    pooled = jnp.concatenate([avg, mx], axis=0)                  # (2, HW) sublane-packed

    wv = w_ref[...]                                              # (2, 49) f32
    col = col_ref[...]                                           # (1, HW) int32
    lane = lax.broadcasted_iota(jnp.int32, (1, HW), 1)           # flat position

    # --- 7 column-shifted, edge-masked copies of the stacked pooled pair ---
    # One XLU roll + one select per kw serves BOTH conv input channels.
    shifted = []
    for kw in range(KSIZE):
        dw = kw - PAD
        if dw == 0:
            shifted.append(pooled)
        else:
            r = pltpu.roll(pooled, (-dw) % HW, axis=1)
            ok = (col >= -dw) if dw < 0 else (col < W - dw)      # (1, HW) bool
            shifted.append(jnp.where(ok, r, 0.0))

    # --- per-kh weighted sums on the (2, HW) stack; row roll + row mask once
    #     on the combined partial ---
    acc2 = jnp.zeros((2, HW), jnp.float32)
    for kh in range(KSIZE):
        dh = kh - PAD
        base = kh * KSIZE
        part = shifted[0] * wv[:, base:base + 1]                 # (2,HW) * (2,1)
        for kw in range(1, KSIZE):
            part = part + shifted[kw] * wv[:, base + kw:base + kw + 1]
        if dh != 0:
            # Row shift == roll by dh*W lanes in the flat layout.
            part = pltpu.roll(part, (-dh * W) % HW, axis=1)
            # Row validity is a contiguous flat-index range -> one lane compare.
            ok = (lane >= -dh * W) if dh < 0 else (lane < (H - dh) * W)
            part = jnp.where(ok, part, 0.0)
        acc2 = acc2 + part

    conv = jnp.sum(acc2, axis=0, keepdims=True) + b_ref[0]       # (1, HW) f32
    att = 0.5 * (jnp.tanh(0.5 * conv) + 1.0)                     # exact sigmoid (EUP tanh)
    # One dense (C, HW) broadcast multiply + store, in the input dtype.
    o_ref[0] = xs * att.astype(xs.dtype)


def spatial_attention(x, conv_w, conv_b):
    """x: (B, C, H, W); conv_w: (1, 2, 7, 7); conv_b: (1,)."""
    B, C, H, W = x.shape
    HW = H * W

    x_flat = x.reshape(B, C, HW)                                   # lane-dense layout
    w2 = conv_w.reshape(2, KSIZE * KSIZE).astype(jnp.float32)      # [ci, kh*7+kw]
    b1 = conv_b.reshape(1).astype(jnp.float32)
    col_idx = (jnp.arange(HW, dtype=jnp.int32) % W).reshape(1, HW)

    kernel = functools.partial(_spatial_attention_kernel, H=H, W=W)

    # VMEM budget from actual sizes: double-buffered in/out slabs plus f32
    # pooled / 7 shifted / accumulator temporaries, with headroom.
    itemsize = jnp.dtype(x.dtype).itemsize
    io_bytes = 2 * 2 * C * HW * itemsize
    tmp_bytes = (C + 24) * HW * 4
    need = int(1.5 * (io_bytes + tmp_bytes)) + (2 << 20)
    vmem_limit = min(112 * 1024 * 1024, max(32 * 1024 * 1024, need))

    out_flat = pl.pallas_call(
        kernel,
        out_shape=jax.ShapeDtypeStruct((B, C, HW), x.dtype),
        grid_spec=pltpu.PrefetchScalarGridSpec(
            num_scalar_prefetch=0,
            grid=(B,),
            in_specs=[
                pl.BlockSpec((2, KSIZE * KSIZE), lambda b: (0, 0)),   # conv weights
                pl.BlockSpec(memory_space=pltpu.MemorySpace.SMEM),    # conv bias
                pl.BlockSpec((1, HW), lambda b: (0, 0)),              # column indices
                pl.BlockSpec((1, C, HW), lambda b: (b, 0, 0)),        # x (one batch)
            ],
            out_specs=pl.BlockSpec((1, C, HW), lambda b: (b, 0, 0)),
        ),
        compiler_params=pltpu.CompilerParams(
            dimension_semantics=("parallel",),
            vmem_limit_bytes=vmem_limit,
        ),
    )(w2, b1, col_idx, x_flat)

    return out_flat.reshape(B, C, H, W)


def spatial_attention_ref(x, conv_w, conv_b):
    """Pure-JAX reference matching the PyTorch module (full-precision conv)."""
    avg_pool = jnp.mean(x, axis=1, keepdims=True)
    max_pool = jnp.max(x, axis=1, keepdims=True)
    pooled = jnp.concatenate([avg_pool, max_pool], axis=1)  # (B, 2, H, W)
    conv = lax.conv_general_dilated(
        pooled, conv_w,
        window_strides=(1, 1),
        padding=[(PAD, PAD), (PAD, PAD)],
        dimension_numbers=("NCHW", "OIHW", "NCHW"),
        precision=lax.Precision.HIGHEST,
    ) + conv_b.reshape(1, 1, 1, 1)
    att = jax.nn.sigmoid(conv)
    return x * att


if __name__ == "__main__":
    key = jax.random.PRNGKey(0)
    kx, kw, kb = jax.random.split(key, 3)

    B, C, H, W = 2, 4, 16, 16
    x = jax.random.normal(kx, (B, C, H, W), dtype=jnp.float32)

    # Deterministic synthetic Conv2d(2, 1, kernel_size=7) parameters.
    fan_in = 2 * KSIZE * KSIZE
    bound = 1.0 / (fan_in ** 0.5)
    conv_w = jax.random.uniform(kw, (1, 2, KSIZE, KSIZE),
                                minval=-bound, maxval=bound, dtype=jnp.float32)
    conv_b = jax.random.uniform(kb, (1,), minval=-bound, maxval=bound,
                                dtype=jnp.float32)

    out = spatial_attention(x, conv_w, conv_b)
    out = jax.block_until_ready(out)

    ref = spatial_attention_ref(x, conv_w, conv_b)
    assert out.shape == (B, C, H, W)
    # f32 accumulation everywhere; tolerance only covers transcendental impls.
    assert jnp.allclose(out, ref, rtol=5e-5, atol=5e-5)

    print("KERNEL_OK")
</pallas_src>

<mosaic_0001>
module attributes {stable_mosaic.version = 11 : i64} {
  func.func @_spatial_attention_kernel(%arg0: i32, %arg1: memref<2x49xf32, #tpu.memory_space<vmem>>, %arg2: memref<1xf32, #tpu.memory_space<smem>>, %arg3: memref<1x256xi32, #tpu.memory_space<vmem>>, %arg4: memref<1x4x256xf32, #tpu.memory_space<vmem>>, %arg5: memref<1x4x256xf32, #tpu.memory_space<vmem>>) attributes {dimension_semantics = [#tpu.dimension_semantics<parallel>], iteration_bounds = array<i64: 2>, scalar_prefetch = 0 : i64, scratch_operands = 0 : i64, tpu.core_type = #tpu.core_type<tc>, window_params = [{pipeline_mode = #tpu.pipeline_mode<synchronous>, transform_indices = @transform_0, window_bounds = array<i64: 2, 49>}, {transform_indices = @transform_1, window_bounds = array<i64: 1>}, {pipeline_mode = #tpu.pipeline_mode<synchronous>, transform_indices = @transform_2, window_bounds = array<i64: 1, 256>}, {transform_indices = @transform_3, window_bounds = array<i64: 1, 4, 256>}, {transform_indices = @transform_4, window_bounds = array<i64: 1, 4, 256>}]} {
    %c0 = arith.constant 0 : index
    %c0_0 = arith.constant 0 : index
    %c0_1 = arith.constant 0 : index
    %0 = vector.load %arg4[%c0, %c0_0, %c0_1] : memref<1x4x256xf32, #tpu.memory_space<vmem>>, vector<1x4x256xf32>
    %1 = vector.shape_cast %0 : vector<1x4x256xf32> to vector<4x256xf32>
    %cst = arith.constant dense<0.000000e+00> : vector<256xf32>
    %2 = vector.multi_reduction <add>, %1, %cst [0] : vector<4x256xf32> to vector<256xf32>
    %3 = vector.shape_cast %2 : vector<256xf32> to vector<1x256xf32>
    %cst_2 = arith.constant 2.500000e-01 : f32
    %4 = vector.broadcast %cst_2 : f32 to vector<1x256xf32>
    %5 = arith.mulf %3, %4 : vector<1x256xf32>
    %cst_3 = arith.constant dense<0xFF800000> : vector<256xf32>
    %6 = vector.multi_reduction <maximumf>, %1, %cst_3 [0] : vector<4x256xf32> to vector<256xf32>
    %7 = vector.shape_cast %6 : vector<256xf32> to vector<1x256xf32>
    %8 = tpu.concatenate %5, %7 in 0 : vector<1x256xf32>, vector<1x256xf32> -> vector<2x256xf32>
    %c0_4 = arith.constant 0 : index
    %c0_5 = arith.constant 0 : index
    %9 = vector.load %arg1[%c0_4, %c0_5] : memref<2x49xf32, #tpu.memory_space<vmem>>, vector<2x49xf32>
    %c0_6 = arith.constant 0 : index
    %c0_7 = arith.constant 0 : index
    %10 = vector.load %arg3[%c0_6, %c0_7] : memref<1x256xi32, #tpu.memory_space<vmem>>, vector<1x256xi32>
    %11 = tpu.iota {dimensions = array<i32: 1>} : vector<1x256xi32>
    %c3_i32 = arith.constant 3 : i32
    %12 = tpu.dynamic_rotate %8 by %c3_i32 dim 1 : vector<2x256xf32>, i32 -> vector<2x256xf32>
    %c3_i32_8 = arith.constant 3 : i32
    %13 = vector.broadcast %c3_i32_8 : i32 to vector<1x256xi32>
    %14 = arith.cmpi sge, %10, %13 : vector<1x256xi32>
    %cst_9 = arith.constant 0.000000e+00 : f32
    %15 = vector.shape_cast %14 : vector<1x256xi1> to vector<1x256xi1>
    %16 = vector.broadcast %15 : vector<1x256xi1> to vector<2x256xi1>
    %17 = vector.broadcast %cst_9 : f32 to vector<2x256xf32>
    %18 = arith.select %16, %12, %17 : vector<2x256xi1>, vector<2x256xf32>
    %c2_i32 = arith.constant 2 : i32
    %19 = tpu.dynamic_rotate %8 by %c2_i32 dim 1 : vector<2x256xf32>, i32 -> vector<2x256xf32>
    %c2_i32_10 = arith.constant 2 : i32
    %20 = vector.broadcast %c2_i32_10 : i32 to vector<1x256xi32>
    %21 = arith.cmpi sge, %10, %20 : vector<1x256xi32>
    %cst_11 = arith.constant 0.000000e+00 : f32
    %22 = vector.shape_cast %21 : vector<1x256xi1> to vector<1x256xi1>
    %23 = vector.broadcast %22 : vector<1x256xi1> to vector<2x256xi1>
    %24 = vector.broadcast %cst_11 : f32 to vector<2x256xf32>
    %25 = arith.select %23, %19, %24 : vector<2x256xi1>, vector<2x256xf32>
    %c1_i32 = arith.constant 1 : i32
    %26 = tpu.dynamic_rotate %8 by %c1_i32 dim 1 : vector<2x256xf32>, i32 -> vector<2x256xf32>
    %c1_i32_12 = arith.constant 1 : i32
    %27 = vector.broadcast %c1_i32_12 : i32 to vector<1x256xi32>
    %28 = arith.cmpi sge, %10, %27 : vector<1x256xi32>
    %cst_13 = arith.constant 0.000000e+00 : f32
    %29 = vector.shape_cast %28 : vector<1x256xi1> to vector<1x256xi1>
    %30 = vector.broadcast %29 : vector<1x256xi1> to vector<2x256xi1>
    %31 = vector.broadcast %cst_13 : f32 to vector<2x256xf32>
    %32 = arith.select %30, %26, %31 : vector<2x256xi1>, vector<2x256xf32>
    %c255_i32 = arith.constant 255 : i32
    %33 = tpu.dynamic_rotate %8 by %c255_i32 dim 1 : vector<2x256xf32>, i32 -> vector<2x256xf32>
    %c15_i32 = arith.constant 15 : i32
    %34 = vector.broadcast %c15_i32 : i32 to vector<1x256xi32>
    %35 = arith.cmpi slt, %10, %34 : vector<1x256xi32>
    %cst_14 = arith.constant 0.000000e+00 : f32
    %36 = vector.shape_cast %35 : vector<1x256xi1> to vector<1x256xi1>
    %37 = vector.broadcast %36 : vector<1x256xi1> to vector<2x256xi1>
    %38 = vector.broadcast %cst_14 : f32 to vector<2x256xf32>
    %39 = arith.select %37, %33, %38 : vector<2x256xi1>, vector<2x256xf32>
    %c254_i32 = arith.constant 254 : i32
    %40 = tpu.dynamic_rotate %8 by %c254_i32 dim 1 : vector<2x256xf32>, i32 -> vector<2x256xf32>
    %c14_i32 = arith.constant 14 : i32
    %41 = vector.broadcast %c14_i32 : i32 to vector<1x256xi32>
    %42 = arith.cmpi slt, %10, %41 : vector<1x256xi32>
    %cst_15 = arith.constant 0.000000e+00 : f32
    %43 = vector.shape_cast %42 : vector<1x256xi1> to vector<1x256xi1>
    %44 = vector.broadcast %43 : vector<1x256xi1> to vector<2x256xi1>
    %45 = vector.broadcast %cst_15 : f32 to vector<2x256xf32>
    %46 = arith.select %44, %40, %45 : vector<2x256xi1>, vector<2x256xf32>
    %c253_i32 = arith.constant 253 : i32
    %47 = tpu.dynamic_rotate %8 by %c253_i32 dim 1 : vector<2x256xf32>, i32 -> vector<2x256xf32>
    %c13_i32 = arith.constant 13 : i32
    %48 = vector.broadcast %c13_i32 : i32 to vector<1x256xi32>
    %49 = arith.cmpi slt, %10, %48 : vector<1x256xi32>
    %cst_16 = arith.constant 0.000000e+00 : f32
    %50 = vector.shape_cast %49 : vector<1x256xi1> to vector<1x256xi1>
    %51 = vector.broadcast %50 : vector<1x256xi1> to vector<2x256xi1>
    %52 = vector.broadcast %cst_16 : f32 to vector<2x256xf32>
    %53 = arith.select %51, %47, %52 : vector<2x256xi1>, vector<2x256xf32>
    %cst_17 = arith.constant 0.000000e+00 : f32
    %54 = vector.broadcast %cst_17 : f32 to vector<2x256xf32>
    %55 = vector.extract_strided_slice %9 {offsets = [0, 0], sizes = [2, 1], strides = [1, 1]} : vector<2x49xf32> to vector<2x1xf32>
    %56 = vector.broadcast %55 : vector<2x1xf32> to vector<2x256xf32>
    %57 = arith.mulf %18, %56 : vector<2x256xf32>
    %58 = vector.extract_strided_slice %9 {offsets = [0, 1], sizes = [2, 1], strides = [1, 1]} : vector<2x49xf32> to vector<2x1xf32>
    %59 = vector.broadcast %58 : vector<2x1xf32> to vector<2x256xf32>
    %60 = arith.mulf %25, %59 : vector<2x256xf32>
    %61 = arith.addf %57, %60 : vector<2x256xf32>
    %62 = vector.extract_strided_slice %9 {offsets = [0, 2], sizes = [2, 1], strides = [1, 1]} : vector<2x49xf32> to vector<2x1xf32>
    %63 = vector.broadcast %62 : vector<2x1xf32> to vector<2x256xf32>
    %64 = arith.mulf %32, %63 : vector<2x256xf32>
    %65 = arith.addf %61, %64 : vector<2x256xf32>
    %66 = vector.extract_strided_slice %9 {offsets = [0, 3], sizes = [2, 1], strides = [1, 1]} : vector<2x49xf32> to vector<2x1xf32>
    %67 = vector.broadcast %66 : vector<2x1xf32> to vector<2x256xf32>
    %68 = arith.mulf %8, %67 : vector<2x256xf32>
    %69 = arith.addf %65, %68 : vector<2x256xf32>
    %70 = vector.extract_strided_slice %9 {offsets = [0, 4], sizes = [2, 1], strides = [1, 1]} : vector<2x49xf32> to vector<2x1xf32>
    %71 = vector.broadcast %70 : vector<2x1xf32> to vector<2x256xf32>
    %72 = arith.mulf %39, %71 : vector<2x256xf32>
    %73 = arith.addf %69, %72 : vector<2x256xf32>
    %74 = vector.extract_strided_slice %9 {offsets = [0, 5], sizes = [2, 1], strides = [1, 1]} : vector<2x49xf32> to vector<2x1xf32>
    %75 = vector.broadcast %74 : vector<2x1xf32> to vector<2x256xf32>
    %76 = arith.mulf %46, %75 : vector<2x256xf32>
    %77 = arith.addf %73, %76 : vector<2x256xf32>
    %78 = vector.extract_strided_slice %9 {offsets = [0, 6], sizes = [2, 1], strides = [1, 1]} : vector<2x49xf32> to vector<2x1xf32>
    %79 = vector.broadcast %78 : vector<2x1xf32> to vector<2x256xf32>
    %80 = arith.mulf %53, %79 : vector<2x256xf32>
    %81 = arith.addf %77, %80 : vector<2x256xf32>
    %c48_i32 = arith.constant 48 : i32
    %82 = tpu.dynamic_rotate %81 by %c48_i32 dim 1 : vector<2x256xf32>, i32 -> vector<2x256xf32>
    %c48_i32_18 = arith.constant 48 : i32
    %83 = vector.broadcast %c48_i32_18 : i32 to vector<1x256xi32>
    %84 = arith.cmpi sge, %11, %83 : vector<1x256xi32>
    %cst_19 = arith.constant 0.000000e+00 : f32
    %85 = vector.shape_cast %84 : vector<1x256xi1> to vector<1x256xi1>
    %86 = vector.broadcast %85 : vector<1x256xi1> to vector<2x256xi1>
    %87 = vector.broadcast %cst_19 : f32 to vector<2x256xf32>
    %88 = arith.select %86, %82, %87 : vector<2x256xi1>, vector<2x256xf32>
    %89 = arith.addf %54, %88 : vector<2x256xf32>
    %90 = vector.extract_strided_slice %9 {offsets = [0, 7], sizes = [2, 1], strides = [1, 1]} : vector<2x49xf32> to vector<2x1xf32>
    %91 = vector.broadcast %90 : vector<2x1xf32> to vector<2x256xf32>
    %92 = arith.mulf %18, %91 : vector<2x256xf32>
    %93 = vector.extract_strided_slice %9 {offsets = [0, 8], sizes = [2, 1], strides = [1, 1]} : vector<2x49xf32> to vector<2x1xf32>
    %94 = vector.broadcast %93 : vector<2x1xf32> to vector<2x256xf32>
    %95 = arith.mulf %25, %94 : vector<2x256xf32>
    %96 = arith.addf %92, %95 : vector<2x256xf32>
    %97 = vector.extract_strided_slice %9 {offsets = [0, 9], sizes = [2, 1], strides = [1, 1]} : vector<2x49xf32> to vector<2x1xf32>
    %98 = vector.broadcast %97 : vector<2x1xf32> to vector<2x256xf32>
    %99 = arith.mulf %32, %98 : vector<2x256xf32>
    %100 = arith.addf %96, %99 : vector<2x256xf32>
    %101 = vector.extract_strided_slice %9 {offsets = [0, 10], sizes = [2, 1], strides = [1, 1]} : vector<2x49xf32> to vector<2x1xf32>
    %102 = vector.broadcast %101 : vector<2x1xf32> to vector<2x256xf32>
    %103 = arith.mulf %8, %102 : vector<2x256xf32>
    %104 = arith.addf %100, %103 : vector<2x256xf32>
    %105 = vector.extract_strided_slice %9 {offsets = [0, 11], sizes = [2, 1], strides = [1, 1]} : vector<2x49xf32> to vector<2x1xf32>
    %106 = vector.broadcast %105 : vector<2x1xf32> to vector<2x256xf32>
    %107 = arith.mulf %39, %106 : vector<2x256xf32>
    %108 = arith.addf %104, %107 : vector<2x256xf32>
    %109 = vector.extract_strided_slice %9 {offsets = [0, 12], sizes = [2, 1], strides = [1, 1]} : vector<2x49xf32> to vector<2x1xf32>
    %110 = vector.broadcast %109 : vector<2x1xf32> to vector<2x256xf32>
    %111 = arith.mulf %46, %110 : vector<2x256xf32>
    %112 = arith.addf %108, %111 : vector<2x256xf32>
    %113 = vector.extract_strided_slice %9 {offsets = [0, 13], sizes = [2, 1], strides = [1, 1]} : vector<2x49xf32> to vector<2x1xf32>
    %114 = vector.broadcast %113 : vector<2x1xf32> to vector<2x256xf32>
    %115 = arith.mulf %53, %114 : vector<2x256xf32>
    %116 = arith.addf %112, %115 : vector<2x256xf32>
    %c32_i32 = arith.constant 32 : i32
    %117 = tpu.dynamic_rotate %116 by %c32_i32 dim 1 : vector<2x256xf32>, i32 -> vector<2x256xf32>
    %c32_i32_20 = arith.constant 32 : i32
    %118 = vector.broadcast %c32_i32_20 : i32 to vector<1x256xi32>
    %119 = arith.cmpi sge, %11, %118 : vector<1x256xi32>
    %cst_21 = arith.constant 0.000000e+00 : f32
    %120 = vector.shape_cast %119 : vector<1x256xi1> to vector<1x256xi1>
    %121 = vector.broadcast %120 : vector<1x256xi1> to vector<2x256xi1>
    %122 = vector.broadcast %cst_21 : f32 to vector<2x256xf32>
    %123 = arith.select %121, %117, %122 : vector<2x256xi1>, vector<2x256xf32>
    %124 = arith.addf %89, %123 : vector<2x256xf32>
    %125 = vector.extract_strided_slice %9 {offsets = [0, 14], sizes = [2, 1], strides = [1, 1]} : vector<2x49xf32> to vector<2x1xf32>
    %126 = vector.broadcast %125 : vector<2x1xf32> to vector<2x256xf32>
    %127 = arith.mulf %18, %126 : vector<2x256xf32>
    %128 = vector.extract_strided_slice %9 {offsets = [0, 15], sizes = [2, 1], strides = [1, 1]} : vector<2x49xf32> to vector<2x1xf32>
    %129 = vector.broadcast %128 : vector<2x1xf32> to vector<2x256xf32>
    %130 = arith.mulf %25, %129 : vector<2x256xf32>
    %131 = arith.addf %127, %130 : vector<2x256xf32>
    %132 = vector.extract_strided_slice %9 {offsets = [0, 16], sizes = [2, 1], strides = [1, 1]} : vector<2x49xf32> to vector<2x1xf32>
    %133 = vector.broadcast %132 : vector<2x1xf32> to vector<2x256xf32>
    %134 = arith.mulf %32, %133 : vector<2x256xf32>
    %135 = arith.addf %131, %134 : vector<2x256xf32>
    %136 = vector.extract_strided_slice %9 {offsets = [0, 17], sizes = [2, 1], strides = [1, 1]} : vector<2x49xf32> to vector<2x1xf32>
    %137 = vector.broadcast %136 : vector<2x1xf32> to vector<2x256xf32>
    %138 = arith.mulf %8, %137 : vector<2x256xf32>
    %139 = arith.addf %135, %138 : vector<2x256xf32>
    %140 = vector.extract_strided_slice %9 {offsets = [0, 18], sizes = [2, 1], strides = [1, 1]} : vector<2x49xf32> to vector<2x1xf32>
    %141 = vector.broadcast %140 : vector<2x1xf32> to vector<2x256xf32>
    %142 = arith.mulf %39, %141 : vector<2x256xf32>
    %143 = arith.addf %139, %142 : vector<2x256xf32>
    %144 = vector.extract_strided_slice %9 {offsets = [0, 19], sizes = [2, 1], strides = [1, 1]} : vector<2x49xf32> to vector<2x1xf32>
    %145 = vector.broadcast %144 : vector<2x1xf32> to vector<2x256xf32>
    %146 = arith.mulf %46, %145 : vector<2x256xf32>
    %147 = arith.addf %143, %146 : vector<2x256xf32>
    %148 = vector.extract_strided_slice %9 {offsets = [0, 20], sizes = [2, 1], strides = [1, 1]} : vector<2x49xf32> to vector<2x1xf32>
    %149 = vector.broadcast %148 : vector<2x1xf32> to vector<2x256xf32>
    %150 = arith.mulf %53, %149 : vector<2x256xf32>
    %151 = arith.addf %147, %150 : vector<2x256xf32>
    %c16_i32 = arith.constant 16 : i32
    %152 = tpu.dynamic_rotate %151 by %c16_i32 dim 1 : vector<2x256xf32>, i32 -> vector<2x256xf32>
    %c16_i32_22 = arith.constant 16 : i32
    %153 = vector.broadcast %c16_i32_22 : i32 to vector<1x256xi32>
    %154 = arith.cmpi sge, %11, %153 : vector<1x256xi32>
    %cst_23 = arith.constant 0.000000e+00 : f32
    %155 = vector.shape_cast %154 : vector<1x256xi1> to vector<1x256xi1>
    %156 = vector.broadcast %155 : vector<1x256xi1> to vector<2x256xi1>
    %157 = vector.broadcast %cst_23 : f32 to vector<2x256xf32>
    %158 = arith.select %156, %152, %157 : vector<2x256xi1>, vector<2x256xf32>
    %159 = arith.addf %124, %158 : vector<2x256xf32>
    %160 = vector.extract_strided_slice %9 {offsets = [0, 21], sizes = [2, 1], strides = [1, 1]} : vector<2x49xf32> to vector<2x1xf32>
    %161 = vector.broadcast %160 : vector<2x1xf32> to vector<2x256xf32>
    %162 = arith.mulf %18, %161 : vector<2x256xf32>
    %163 = vector.extract_strided_slice %9 {offsets = [0, 22], sizes = [2, 1], strides = [1, 1]} : vector<2x49xf32> to vector<2x1xf32>
    %164 = vector.broadcast %163 : vector<2x1xf32> to vector<2x256xf32>
    %165 = arith.mulf %25, %164 : vector<2x256xf32>
    %166 = arith.addf %162, %165 : vector<2x256xf32>
    %167 = vector.extract_strided_slice %9 {offsets = [0, 23], sizes = [2, 1], strides = [1, 1]} : vector<2x49xf32> to vector<2x1xf32>
    %168 = vector.broadcast %167 : vector<2x1xf32> to vector<2x256xf32>
    %169 = arith.mulf %32, %168 : vector<2x256xf32>
    %170 = arith.addf %166, %169 : vector<2x256xf32>
    %171 = vector.extract_strided_slice %9 {offsets = [0, 24], sizes = [2, 1], strides = [1, 1]} : vector<2x49xf32> to vector<2x1xf32>
    %172 = vector.broadcast %171 : vector<2x1xf32> to vector<2x256xf32>
    %173 = arith.mulf %8, %172 : vector<2x256xf32>
    %174 = arith.addf %170, %173 : vector<2x256xf32>
    %175 = vector.extract_strided_slice %9 {offsets = [0, 25], sizes = [2, 1], strides = [1, 1]} : vector<2x49xf32> to vector<2x1xf32>
    %176 = vector.broadcast %175 : vector<2x1xf32> to vector<2x256xf32>
    %177 = arith.mulf %39, %176 : vector<2x256xf32>
    %178 = arith.addf %174, %177 : vector<2x256xf32>
    %179 = vector.extract_strided_slice %9 {offsets = [0, 26], sizes = [2, 1], strides = [1, 1]} : vector<2x49xf32> to vector<2x1xf32>
    %180 = vector.broadcast %179 : vector<2x1xf32> to vector<2x256xf32>
    %181 = arith.mulf %46, %180 : vector<2x256xf32>
    %182 = arith.addf %178, %181 : vector<2x256xf32>
    %183 = vector.extract_strided_slice %9 {offsets = [0, 27], sizes = [2, 1], strides = [1, 1]} : vector<2x49xf32> to vector<2x1xf32>
    %184 = vector.broadcast %183 : vector<2x1xf32> to vector<2x256xf32>
    %185 = arith.mulf %53, %184 : vector<2x256xf32>
    %186 = arith.addf %182, %185 : vector<2x256xf32>
    %187 = arith.addf %159, %186 : vector<2x256xf32>
    %188 = vector.extract_strided_slice %9 {offsets = [0, 28], sizes = [2, 1], strides = [1, 1]} : vector<2x49xf32> to vector<2x1xf32>
    %189 = vector.broadcast %188 : vector<2x1xf32> to vector<2x256xf32>
    %190 = arith.mulf %18, %189 : vector<2x256xf32>
    %191 = vector.extract_strided_slice %9 {offsets = [0, 29], sizes = [2, 1], strides = [1, 1]} : vector<2x49xf32> to vector<2x1xf32>
    %192 = vector.broadcast %191 : vector<2x1xf32> to vector<2x256xf32>
    %193 = arith.mulf %25, %192 : vector<2x256xf32>
    %194 = arith.addf %190, %193 : vector<2x256xf32>
    %195 = vector.extract_strided_slice %9 {offsets = [0, 30], sizes = [2, 1], strides = [1, 1]} : vector<2x49xf32> to vector<2x1xf32>
    %196 = vector.broadcast %195 : vector<2x1xf32> to vector<2x256xf32>
    %197 = arith.mulf %32, %196 : vector<2x256xf32>
    %198 = arith.addf %194, %197 : vector<2x256xf32>
    %199 = vector.extract_strided_slice %9 {offsets = [0, 31], sizes = [2, 1], strides = [1, 1]} : vector<2x49xf32> to vector<2x1xf32>
    %200 = vector.broadcast %199 : vector<2x1xf32> to vector<2x256xf32>
    %201 = arith.mulf %8, %200 : vector<2x256xf32>
    %202 = arith.addf %198, %201 : vector<2x256xf32>
    %203 = vector.extract_strided_slice %9 {offsets = [0, 32], sizes = [2, 1], strides = [1, 1]} : vector<2x49xf32> to vector<2x1xf32>
    %204 = vector.broadcast %203 : vector<2x1xf32> to vector<2x256xf32>
    %205 = arith.mulf %39, %204 : vector<2x256xf32>
    %206 = arith.addf %202, %205 : vector<2x256xf32>
    %207 = vector.extract_strided_slice %9 {offsets = [0, 33], sizes = [2, 1], strides = [1, 1]} : vector<2x49xf32> to vector<2x1xf32>
    %208 = vector.broadcast %207 : vector<2x1xf32> to vector<2x256xf32>
    %209 = arith.mulf %46, %208 : vector<2x256xf32>
    %210 = arith.addf %206, %209 : vector<2x256xf32>
    %211 = vector.extract_strided_slice %9 {offsets = [0, 34], sizes = [2, 1], strides = [1, 1]} : vector<2x49xf32> to vector<2x1xf32>
    %212 = vector.broadcast %211 : vector<2x1xf32> to vector<2x256xf32>
    %213 = arith.mulf %53, %212 : vector<2x256xf32>
    %214 = arith.addf %210, %213 : vector<2x256xf32>
    %c240_i32 = arith.constant 240 : i32
    %215 = tpu.dynamic_rotate %214 by %c240_i32 dim 1 : vector<2x256xf32>, i32 -> vector<2x256xf32>
    %c240_i32_24 = arith.constant 240 : i32
    %216 = vector.broadcast %c240_i32_24 : i32 to vector<1x256xi32>
    %217 = arith.cmpi slt, %11, %216 : vector<1x256xi32>
    %cst_25 = arith.constant 0.000000e+00 : f32
    %218 = vector.shape_cast %217 : vector<1x256xi1> to vector<1x256xi1>
    %219 = vector.broadcast %218 : vector<1x256xi1> to vector<2x256xi1>
    %220 = vector.broadcast %cst_25 : f32 to vector<2x256xf32>
    %221 = arith.select %219, %215, %220 : vector<2x256xi1>, vector<2x256xf32>
    %222 = arith.addf %187, %221 : vector<2x256xf32>
    %223 = vector.extract_strided_slice %9 {offsets = [0, 35], sizes = [2, 1], strides = [1, 1]} : vector<2x49xf32> to vector<2x1xf32>
    %224 = vector.broadcast %223 : vector<2x1xf32> to vector<2x256xf32>
    %225 = arith.mulf %18, %224 : vector<2x256xf32>
    %226 = vector.extract_strided_slice %9 {offsets = [0, 36], sizes = [2, 1], strides = [1, 1]} : vector<2x49xf32> to vector<2x1xf32>
    %227 = vector.broadcast %226 : vector<2x1xf32> to vector<2x256xf32>
    %228 = arith.mulf %25, %227 : vector<2x256xf32>
    %229 = arith.addf %225, %228 : vector<2x256xf32>
    %230 = vector.extract_strided_slice %9 {offsets = [0, 37], sizes = [2, 1], strides = [1, 1]} : vector<2x49xf32> to vector<2x1xf32>
    %231 = vector.broadcast %230 : vector<2x1xf32> to vector<2x256xf32>
    %232 = arith.mulf %32, %231 : vector<2x256xf32>
    %233 = arith.addf %229, %232 : vector<2x256xf32>
    %234 = vector.extract_strided_slice %9 {offsets = [0, 38], sizes = [2, 1], strides = [1, 1]} : vector<2x49xf32> to vector<2x1xf32>
    %235 = vector.broadcast %234 : vector<2x1xf32> to vector<2x256xf32>
    %236 = arith.mulf %8, %235 : vector<2x256xf32>
    %237 = arith.addf %233, %236 : vector<2x256xf32>
    %238 = vector.extract_strided_slice %9 {offsets = [0, 39], sizes = [2, 1], strides = [1, 1]} : vector<2x49xf32> to vector<2x1xf32>
    %239 = vector.broadcast %238 : vector<2x1xf32> to vector<2x256xf32>
    %240 = arith.mulf %39, %239 : vector<2x256xf32>
    %241 = arith.addf %237, %240 : vector<2x256xf32>
    %242 = vector.extract_strided_slice %9 {offsets = [0, 40], sizes = [2, 1], strides = [1, 1]} : vector<2x49xf32> to vector<2x1xf32>
    %243 = vector.broadcast %242 : vector<2x1xf32> to vector<2x256xf32>
    %244 = arith.mulf %46, %243 : vector<2x256xf32>
    %245 = arith.addf %241, %244 : vector<2x256xf32>
    %246 = vector.extract_strided_slice %9 {offsets = [0, 41], sizes = [2, 1], strides = [1, 1]} : vector<2x49xf32> to vector<2x1xf32>
    %247 = vector.broadcast %246 : vector<2x1xf32> to vector<2x256xf32>
    %248 = arith.mulf %53, %247 : vector<2x256xf32>
    %249 = arith.addf %245, %248 : vector<2x256xf32>
    %c224_i32 = arith.constant 224 : i32
    %250 = tpu.dynamic_rotate %249 by %c224_i32 dim 1 : vector<2x256xf32>, i32 -> vector<2x256xf32>
    %c224_i32_26 = arith.constant 224 : i32
    %251 = vector.broadcast %c224_i32_26 : i32 to vector<1x256xi32>
    %252 = arith.cmpi slt, %11, %251 : vector<1x256xi32>
    %cst_27 = arith.constant 0.000000e+00 : f32
    %253 = vector.shape_cast %252 : vector<1x256xi1> to vector<1x256xi1>
    %254 = vector.broadcast %253 : vector<1x256xi1> to vector<2x256xi1>
    %255 = vector.broadcast %cst_27 : f32 to vector<2x256xf32>
    %256 = arith.select %254, %250, %255 : vector<2x256xi1>, vector<2x256xf32>
    %257 = arith.addf %222, %256 : vector<2x256xf32>
    %258 = vector.extract_strided_slice %9 {offsets = [0, 42], sizes = [2, 1], strides = [1, 1]} : vector<2x49xf32> to vector<2x1xf32>
    %259 = vector.broadcast %258 : vector<2x1xf32> to vector<2x256xf32>
    %260 = arith.mulf %18, %259 : vector<2x256xf32>
    %261 = vector.extract_strided_slice %9 {offsets = [0, 43], sizes = [2, 1], strides = [1, 1]} : vector<2x49xf32> to vector<2x1xf32>
    %262 = vector.broadcast %261 : vector<2x1xf32> to vector<2x256xf32>
    %263 = arith.mulf %25, %262 : vector<2x256xf32>
    %264 = arith.addf %260, %263 : vector<2x256xf32>
    %265 = vector.extract_strided_slice %9 {offsets = [0, 44], sizes = [2, 1], strides = [1, 1]} : vector<2x49xf32> to vector<2x1xf32>
    %266 = vector.broadcast %265 : vector<2x1xf32> to vector<2x256xf32>
    %267 = arith.mulf %32, %266 : vector<2x256xf32>
    %268 = arith.addf %264, %267 : vector<2x256xf32>
    %269 = vector.extract_strided_slice %9 {offsets = [0, 45], sizes = [2, 1], strides = [1, 1]} : vector<2x49xf32> to vector<2x1xf32>
    %270 = vector.broadcast %269 : vector<2x1xf32> to vector<2x256xf32>
    %271 = arith.mulf %8, %270 : vector<2x256xf32>
    %272 = arith.addf %268, %271 : vector<2x256xf32>
    %273 = vector.extract_strided_slice %9 {offsets = [0, 46], sizes = [2, 1], strides = [1, 1]} : vector<2x49xf32> to vector<2x1xf32>
    %274 = vector.broadcast %273 : vector<2x1xf32> to vector<2x256xf32>
    %275 = arith.mulf %39, %274 : vector<2x256xf32>
    %276 = arith.addf %272, %275 : vector<2x256xf32>
    %277 = vector.extract_strided_slice %9 {offsets = [0, 47], sizes = [2, 1], strides = [1, 1]} : vector<2x49xf32> to vector<2x1xf32>
    %278 = vector.broadcast %277 : vector<2x1xf32> to vector<2x256xf32>
    %279 = arith.mulf %46, %278 : vector<2x256xf32>
    %280 = arith.addf %276, %279 : vector<2x256xf32>
    %281 = vector.extract_strided_slice %9 {offsets = [0, 48], sizes = [2, 1], strides = [1, 1]} : vector<2x49xf32> to vector<2x1xf32>
    %282 = vector.broadcast %281 : vector<2x1xf32> to vector<2x256xf32>
    %283 = arith.mulf %53, %282 : vector<2x256xf32>
    %284 = arith.addf %280, %283 : vector<2x256xf32>
    %c208_i32 = arith.constant 208 : i32
    %285 = tpu.dynamic_rotate %284 by %c208_i32 dim 1 : vector<2x256xf32>, i32 -> vector<2x256xf32>
    %c208_i32_28 = arith.constant 208 : i32
    %286 = vector.broadcast %c208_i32_28 : i32 to vector<1x256xi32>
    %287 = arith.cmpi slt, %11, %286 : vector<1x256xi32>
    %cst_29 = arith.constant 0.000000e+00 : f32
    %288 = vector.shape_cast %287 : vector<1x256xi1> to vector<1x256xi1>
    %289 = vector.broadcast %288 : vector<1x256xi1> to vector<2x256xi1>
    %290 = vector.broadcast %cst_29 : f32 to vector<2x256xf32>
    %291 = arith.select %289, %285, %290 : vector<2x256xi1>, vector<2x256xf32>
    %292 = arith.addf %257, %291 : vector<2x256xf32>
    %cst_30 = arith.constant dense<0.000000e+00> : vector<256xf32>
    %293 = vector.multi_reduction <add>, %292, %cst_30 [0] : vector<2x256xf32> to vector<256xf32>
    %294 = vector.shape_cast %293 : vector<256xf32> to vector<1x256xf32>
    %c0_31 = arith.constant 0 : index
    %295 = memref.load %arg2[%c0_31] : memref<1xf32, #tpu.memory_space<smem>>
    %296 = vector.broadcast %295 : f32 to vector<1x256xf32>
    %297 = arith.addf %294, %296 : vector<1x256xf32>
    %cst_32 = arith.constant 5.000000e-01 : f32
    %298 = vector.broadcast %cst_32 : f32 to vector<1x256xf32>
    %299 = arith.mulf %298, %297 : vector<1x256xf32>
    %300 = math.tanh %299 : vector<1x256xf32>
    %cst_33 = arith.constant 1.000000e+00 : f32
    %301 = vector.broadcast %cst_33 : f32 to vector<1x256xf32>
    %302 = arith.addf %300, %301 : vector<1x256xf32>
    %cst_34 = arith.constant 5.000000e-01 : f32
    %303 = vector.broadcast %cst_34 : f32 to vector<1x256xf32>
    %304 = arith.mulf %303, %302 : vector<1x256xf32>
    %305 = vector.broadcast %304 : vector<1x256xf32> to vector<4x256xf32>
    %306 = arith.mulf %1, %305 : vector<4x256xf32>
    %c0_35 = arith.constant 0 : index
    %c0_36 = arith.constant 0 : index
    %c0_37 = arith.constant 0 : index
    %307 = vector.load %arg5[%c0_35, %c0_36, %c0_37] : memref<1x4x256xf32, #tpu.memory_space<vmem>>, vector<1x4x256xf32>
    %308 = vector.shape_cast %307 : vector<1x4x256xf32> to vector<4x256xf32>
    %309 = vector.shape_cast %306 : vector<4x256xf32> to vector<1x4x256xf32>
    tpu.vector_store %arg5[%c0_35, %c0_36, %c0_37], %309 {strides = array<i32>} : memref<1x4x256xf32, #tpu.memory_space<vmem>>, vector<1x4x256xf32>,
    return
  }
  func.func @transform_0(%arg0: i32) -> (i32, i32) {
    %c0_i32 = arith.constant 0 : i32
    %c0_i32_0 = arith.constant 0 : i32
    %c0_i32_1 = arith.constant 0 : i32
    return %c0_i32, %c0_i32_0 : i32, i32
  }
  func.func @transform_1(%arg0: i32) -> i32 {
    %c0_i32 = arith.constant 0 : i32
    %c0_i32_0 = arith.constant 0 : i32
    return %c0_i32 : i32
  }
  func.func @transform_2(%arg0: i32) -> (i32, i32) {
    %c0_i32 = arith.constant 0 : i32
    %c0_i32_0 = arith.constant 0 : i32
    %c0_i32_1 = arith.constant 0 : i32
    return %c0_i32, %c0_i32_0 : i32, i32
  }
  func.func @transform_3(%arg0: i32) -> (i32, i32, i32) {
    %c0_i32 = arith.constant 0 : i32
    %c0_i32_0 = arith.constant 0 : i32
    %c0_i32_1 = arith.constant 0 : i32
    return %arg0, %c0_i32, %c0_i32_0 : i32, i32, i32
  }
  func.func @transform_4(%arg0: i32) -> (i32, i32, i32) {
    %c0_i32 = arith.constant 0 : i32
    %c0_i32_0 = arith.constant 0 : i32
    %c0_i32_1 = arith.constant 0 : i32
    return %arg0, %c0_i32, %c0_i32_0 : i32, i32, i32
  }
}

</mosaic_0001>

<llo_original>
// kernel: tpu_custom_call.1
$region0: #{tpu_custom_call.1}
  #allocation0 [shape = 'u32[]', space=smem, size = 0x4, offset = 0x4, fixed_abs, tag = 'smem constant byte address 0x4 - core index']
  #allocation1 [shape = 'u32[144,128]{1,0:T(1,128)}', space=vmem, size = 0x12000, scoped, tag = 'internal scratch']
  #allocation2 [shape = 'f32[1]{0:T(128)S(6)}', space=smem, size = 0x200, scoped, tag = 'scoped memory for tpu_custom_call.1']
  %s0 = inlined_call_operand.vmem [shape: f32[2,49], index: 0, kind: input, shape index: {}]
  %s1 = inlined_call_operand.<no memory space> [shape: f32[1], index: 1, kind: input, shape index: {}]
  %s2 = inlined_call_operand.vmem [shape: s32[1,256], index: 2, kind: input, shape index: {}]
  %s3 = inlined_call_operand.hbm [shape: f32[2,4,256], index: 3, kind: input, shape index: {}]
  %s4 = inlined_call_operand.hbm [shape: f32[2,4,256], index: 4, kind: output, shape index: {}]
  %s5 = sld [smem:[#allocation0]]
  $region53: #{tpu_custom_call.1} parent=0
    _
  %s7 = ssub.s32 1, %s5
  %s8 = scalar_select 0, %s7, %s5
  %9 = sst [smem:[#allocation2]] %s1
  $region1: #{tpu_custom_call.1} parent=0
    #allocation3 [shape = 'u8[8192]{0}', space=vmem, size = 0x2000, scoped, tag = 'input window, operand 3']
    #allocation4 [shape = 's32[2]{0}', space=sflag, size = 0x8, scoped, tag = 'scoped memory for tpu_custom_call.1']
    #allocation5 [shape = 's32[2]{0}', space=sflag, size = 0x8, scoped, tag = 'scoped memory for tpu_custom_call.1']
    #allocation6 [shape = 'u8[8192]{0}', space=vmem, size = 0x2000, scoped, tag = 'output window, operand 0']
    %10 = vsyncpa [#allocation4], 0
    %s11 = scalar_lea.sflag [#allocation4], 1
    %12 = vsyncpa %s11, 0
    %13 = vsyncpa [#allocation5], 0
    %s14 = scalar_lea.sflag [#allocation5], 1
    %15 = vsyncpa %s14, 0
    loop: start=0, step=1, limit=4
    $region2: #{tpu_custom_call.1} parent=1 // loop_pre_header
      _
    $region3: #{tpu_custom_call.1} parent=1 // loop_header
      %s17 = sphi 0, %s21
      %p18 = scmp.ge.s32.totalorder %s17, 4
      %s25 = sphi 0, %s25
      %s27 = sphi 0, %s25
      %s28 = sphi 0, %s27
      %s42 = sphi 0, %s28
      %s46 = sphi 0, %s46
      %s48 = sphi 0, %s46
      %s49 = sphi 0, %s48
      %s63 = sphi 0, %s49
      %s67 = sphi 0, %s67
      %s69 = sphi 0, %s67
      %s70 = sphi 0, %s69
      %s84 = sphi 0, %s70
      %s90 = sphi 0, %s92
      %s93 = sphi 0, %s90
      %s94 = sphi 0, %s93
      %s110 = sphi 0, %s94
      %s116 = sphi 0, %s118
      %s119 = sphi 0, %s116
      %s120 = sphi 0, %s119
      %s136 = sphi 0, %s120
    $region4: #{tpu_custom_call.1} parent=1 // loop_header_branch
      %20 = sbr.rel (%p18) target = $region8
    $region5: #{tpu_custom_call.1} parent=1 // loop_body
      %s22 = ssub.s32 %s17, 1
      %s23 = ssub.s32 %s17, 2
      %s24 = sadd.s32 %s17, 1
      %s26 = sadd.s32 %s25, 1
      %p29 = scmp.eq.s32.totalorder %s17, 1
      %p30 = scmp.ne.s32.totalorder %s25, %s27
      %p31 = scmp.eq.s32.totalorder %s17, 0
      %p32 = por %p30, %p31
      %p33 = scmp.ne.s32.totalorder %s25, %s27
      %p34 = scmp.eq.s32.totalorder %s22, 1
      %p35 = por %p33, %p34
      %p36 = scmp.ne.s32.totalorder %s27, %s28
      %p37 = scmp.eq.s32.totalorder %s22, 0
      %p38 = por %p36, %p37
      %p39 = scmp.ne.s32.totalorder %s27, %s28
      %p40 = scmp.eq.s32.totalorder %s23, 1
      %p41 = por %p39, %p40
      %p43 = scmp.ne.s32.totalorder %s28, %s42
      %p44 = scmp.eq.s32.totalorder %s23, 0
      %p45 = por %p43, %p44
      %s47 = sadd.s32 %s46, 1
      %p50 = scmp.eq.s32.totalorder %s17, 1
      %p51 = scmp.ne.s32.totalorder %s46, %s48
      %p52 = scmp.eq.s32.totalorder %s17, 0
      %p53 = por %p51, %p52
      %p54 = scmp.ne.s32.totalorder %s46, %s48
      %p55 = scmp.eq.s32.totalorder %s22, 1
      %p56 = por %p54, %p55
      %p57 = scmp.ne.s32.totalorder %s48, %s49
      %p58 = scmp.eq.s32.totalorder %s22, 0
      %p59 = por %p57, %p58
      %p60 = scmp.ne.s32.totalorder %s48, %s49
      %p61 = scmp.eq.s32.totalorder %s23, 1
      %p62 = por %p60, %p61
      %p64 = scmp.ne.s32.totalorder %s49, %s63
      %p65 = scmp.eq.s32.totalorder %s23, 0
      %p66 = por %p64, %p65
      %s68 = sadd.s32 %s67, 1
      %p71 = scmp.eq.s32.totalorder %s17, 1
      %p72 = scmp.ne.s32.totalorder %s67, %s69
      %p73 = scmp.eq.s32.totalorder %s17, 0
      %p74 = por %p72, %p73
      %p75 = scmp.ne.s32.totalorder %s67, %s69
      %p76 = scmp.eq.s32.totalorder %s22, 1
      %p77 = por %p75, %p76
      %p78 = scmp.ne.s32.totalorder %s69, %s70
      %p79 = scmp.eq.s32.totalorder %s22, 0
      %p80 = por %p78, %p79
      %p81 = scmp.ne.s32.totalorder %s69, %s70
      %p82 = scmp.eq.s32.totalorder %s23, 1
      %p83 = por %p81, %p82
      %p85 = scmp.ne.s32.totalorder %s70, %s84
      %p86 = scmp.eq.s32.totalorder %s23, 0
      %p87 = por %p85, %p86
      %s88 = ssub.s32 %s17, %s24
      %p89 = scmp.eq.s32.totalorder %s88, 0
      %s91 = sadd.s32 %s90, 1
      %s92 = scalar_select %p89, %s90, %s91
      %p95 = pneg %p89
      %p96 = scmp.eq.s32.totalorder %s17, 1
      %p97 = por %p95, %p96
      %p98 = scmp.ne.s32.totalorder %s90, %s93
      %p99 = scmp.eq.s32.totalorder %s17, 0
      %p100 = por %p98, %p99
      %p101 = scmp.ne.s32.totalorder %s90, %s93
      %p102 = scmp.eq.s32.totalorder %s22, 1
      %p103 = por %p101, %p102
      %p104 = scmp.ne.s32.totalorder %s93, %s94
      %p105 = scmp.eq.s32.totalorder %s22, 0
      %p106 = por %p104, %p105
      %p107 = scmp.ne.s32.totalorder %s93, %s94
      %p108 = scmp.eq.s32.totalorder %s23, 1
      %p109 = por %p107, %p108
      %p111 = scmp.ne.s32.totalorder %s94, %s110
      %p112 = scmp.eq.s32.totalorder %s23, 0
      %p113 = por %p111, %p112
      %s114 = ssub.s32 %s17, %s24
      %p115 = scmp.eq.s32.totalorder %s114, 0
      %s117 = sadd.s32 %s116, 1
      %s118 = scalar_select %p115, %s116, %s117
      %p121 = pneg %p115
      %p122 = scmp.eq.s32.totalorder %s17, 1
      %p123 = por %p121, %p122
      %p124 = scmp.ne.s32.totalorder %s116, %s119
      %p125 = scmp.eq.s32.totalorder %s17, 0
      %p126 = por %p124, %p125
      %p127 = scmp.ne.s32.totalorder %s116, %s119
      %p128 = scmp.eq.s32.totalorder %s22, 1
      %p129 = por %p127, %p128
      %p130 = scmp.ne.s32.totalorder %s119, %s120
      %p131 = scmp.eq.s32.totalorder %s22, 0
      %p132 = por %p130, %p131
      %p133 = scmp.ne.s32.totalorder %s119, %s120
      %p134 = scmp.eq.s32.totalorder %s23, 1
      %p135 = por %p133, %p134
      %p137 = scmp.ne.s32.totalorder %s120, %s136
      %p138 = scmp.eq.s32.totalorder %s23, 0
      %p139 = por %p137, %p138
      %p140 = scmp.le.s32.totalorder 1, %s17
      %p141 = scmp.lt.s32.totalorder %s17, 3
      %p142 = pnand %p140, %p141
      %p143 = pneg %p142
      // Predicated region
      $region9: #{tpu_custom_call.1} parent=5 // pred_check
        _
      $region10: #{tpu_custom_call.1} parent=5 // pred_check_branch
        %145 = sbr.rel (%p142) target = $region12
      $region11: #{tpu_custom_call.1} parent=5 // pred_region
        %s146 = ssub.s32 %s17, 1
        // Predicated region
        $region13: #{tpu_custom_call.1} parent=11 // pred_check
          %p147 = pneg %p38
        $region14: #{tpu_custom_call.1} parent=11 // pred_check_branch
          %149 = sbr.rel (%p147) target = $region16
        $region15: #{tpu_custom_call.1} parent=11 // pred_region
          _
        $region16: #{tpu_custom_call.1} parent=11 // pred_fallthru
          _
        // Predicated region
        $region17: #{tpu_custom_call.1} parent=11 // pred_check
          %p150 = pneg %p59
        $region18: #{tpu_custom_call.1} parent=11 // pred_check_branch
          %152 = sbr.rel (%p150) target = $region20
        $region19: #{tpu_custom_call.1} parent=11 // pred_region
          _
        $region20: #{tpu_custom_call.1} parent=11 // pred_fallthru
          _
        // Predicated region
        $region21: #{tpu_custom_call.1} parent=11 // pred_check
          %p153 = pneg %p80
        $region22: #{tpu_custom_call.1} parent=11 // pred_check_branch
          %155 = sbr.rel (%p153) target = $region24
        $region23: #{tpu_custom_call.1} parent=11 // pred_region
          _
        $region24: #{tpu_custom_call.1} parent=11 // pred_fallthru
          _
      $region12: #{tpu_custom_call.1} parent=5 // pred_fallthru
        _
      %p156 = scmp.lt.s32.totalorder %s17, 2
      // Predicated region
      $region25: #{tpu_custom_call.1} parent=5 // pred_check
        %p157 = pneg %p156
      $region26: #{tpu_custom_call.1} parent=5 // pred_check_branch
        %159 = sbr.rel (%p157) target = $region28
      $region27: #{tpu_custom_call.1} parent=5 // pred_region
        // Predicated region
        $region29: #{tpu_custom_call.1} parent=27 // pred_check
          %p160 = pneg %p100
        $region30: #{tpu_custom_call.1} parent=27 // pred_check_branch
          %162 = sbr.rel (%p160) target = $region32
        $region31: #{tpu_custom_call.1} parent=27 // pred_region
          %s163 = sand.u32 %s90, 1
          %s164 = scalar_lea.sflag [#allocation4], %s163
          %s165 = sand.u32 %s90, 1
          %s166 = smul.addr %s165, 8
          %s167 = scalar_lea.vmem [#allocation3], %s166
          %s169 = ssub.s32 128, 128
          %170 = vsyncadd %s164, %s169
          %s171 = smul.addr %s17, 2
          %s172 = smul.addr %s171, 64
          %s173 = scalar_lea.hbm %s3, %s172
          %s175 = sshll.u32 %s167, 4
          %s176 = int_to_ptr.vmem [resolvable:$true] %s175
          %178 = dma.hbm_to_vmem [thread:$0]  %s173, 128, %s176, %s164
        $region32: #{tpu_custom_call.1} parent=27 // pred_fallthru
          _
      $region28: #{tpu_custom_call.1} parent=5 // pred_fallthru
        _
      %p179 = scmp.le.s32.totalorder 1, %s17
      %p180 = scmp.lt.s32.totalorder %s17, 3
      %p181 = pnand %p179, %p180
      %p182 = pneg %p181
      // Predicated region
      $region33: #{tpu_custom_call.1} parent=5 // pred_check
        _
      $region34: #{tpu_custom_call.1} parent=5 // pred_check_branch
        %184 = sbr.rel (%p181) target = $region36
      $region35: #{tpu_custom_call.1} parent=5 // pred_region
        %s185 = ssub.s32 %s17, 1
        %s186 = sand.u32 %s93, 1
        %s187 = scalar_lea.sflag [#allocation4], %s186
        %s188 = sand.u32 %s93, 1
        %s189 = smul.addr %s188, 8
        %s190 = scalar_lea.vmem [#allocation3], %s189
        // Predicated region
        $region37: #{tpu_custom_call.1} parent=35 // pred_check
          %p191 = pneg %p106
        $region38: #{tpu_custom_call.1} parent=35 // pred_check_branch
          %193 = sbr.rel (%p191) target = $region40
        $region39: #{tpu_custom_call.1} parent=35 // pred_region
          %194 = dma.done %s187, 128
        $region40: #{tpu_custom_call.1} parent=35 // pred_fallthru
          _
        %p195 = pneg %p38
        %p196 = pneg %p35
        %p197 = pneg %p59
        %p198 = pneg %p56
        %p199 = pneg %p80
        %p200 = pneg %p77
        %s201 = sand.u32 %s93, 1
        %s202 = scalar_lea.sflag [#allocation4], %s201
        %s203 = sand.u32 %s93, 1
        %s204 = smul.addr %s203, 8
        %s205 = scalar_lea.vmem [#allocation3], %s204
        %p206 = pneg %p106
        %p207 = pneg %p103
        %p208 = pneg %p132
        %p209 = pneg %p129
        %s210 = sand.u32 %s119, 1
        %s211 = scalar_lea.sflag [#allocation5], %s210
        %s212 = sand.u32 %s119, 1
        %s213 = smul.addr %s212, 8
        %s214 = scalar_lea.vmem [#allocation6], %s213
        %v215 = vld [vmem:[%s190] sm:$0xff]
        %v217 = vcombine.high %v215, %v215
        %vm219 = vcmask 1043456
        %v220 = vsel %vm219, %v215, 0.0
        %v221 = vrot.slane %v220, 4
        %v222 = vadd.f32 %v220, %v221
        %v223 = vrot.slane %v222, 2
        %v224 = vadd.f32 %v222, %v223
        %v225 = vrot.slane %v224, 1
        %v226 = vadd.f32 %v224, %v225
        %v227 = vsel %vm219, %v217, 0.0
        %v228 = vrot.slane %v227, 4
        %v229 = vadd.f32 %v227, %v228
        %v230 = vrot.slane %v229, 2
        %v231 = vadd.f32 %v229, %v230
        %v232 = vrot.slane %v231, 1
        %v233 = vadd.f32 %v231, %v232
        %v234 = vmul.f32 %v226, 0.25
        %v235 = vmul.f32 %v233, 0.25
        %v236 = vsel %vm219, %v215, -inf
        %v237 = vrot.slane %v236, 4
        %v238 = vmax.f32 %v236, %v237
        %v239 = vrot.slane %v238, 2
        %v240 = vmax.f32 %v238, %v239
        %v241 = vrot.slane %v240, 1
        %v242 = vmax.f32 %v240, %v241
        %v243 = vsel %vm219, %v217, -inf
        %v244 = vrot.slane %v243, 4
        %v245 = vmax.f32 %v243, %v244
        %v246 = vrot.slane %v245, 2
        %v247 = vmax.f32 %v245, %v246
        %v248 = vrot.slane %v247, 1
        %v249 = vmax.f32 %v247, %v248
        %vm250 = vcmask 1040384
        %v251 = vsel %vm250, %v234, %v242
        %v252 = vsel %vm250, %v235, %v249
        %v253 = vld [vmem:[%s0] sm:$0x3]
        %v254 = vld [vmem:[%s2] sm:$0x3]
        %v255 = vlaneseq
        %v256 = vand.u32 %v255, 127
        %v257 = vadd.s32 %v256, 128
        %258 = vrot.lane.b32.xlu0 %v251, 3
        %v259 = vpop.permute.xlu0 %258
        %260 = vrot.lane.b32.xlu0 %v252, 3
        %v261 = vpop.permute.xlu0 %260
        %vm262 = vcmp.lt.s32.totalorder %v256, 3
        %v263 = vsel %vm262, %v259, %v261
        %v264 = vsel %vm262, %v261, %v259
        %vm265 = vcmp.ge.s32.totalorder %v254, 3
        %v266 = vsel %vm265, 1, 0
        %v267 = vlaneseq
        %v268 = vshrl.u32 %v267, 7
        %v269 = vsub.s32 0, %v268
        %v270 = vrot.slane %v266, %v269
        %v271 = vlaneseq
        %v272 = vshrl.u32 %v271, 7
        %v273 = vsub.s32 1, %v272
        %v274 = vrot.slane %v266, %v273
        %vm275 = vcmp.eq.s32.totalorder %v270, 1
        %vm276 = vcmp.eq.s32.totalorder %v274, 1
        %v277 = vsel %vm275, %v264, 0.0
        %v278 = vsel %vm276, %v263, 0.0
        %279 = vrot.lane.b32.xlu0 %v251, 2
        %v280 = vpop.permute.xlu0 %279
        %281 = vrot.lane.b32.xlu0 %v252, 2
        %v282 = vpop.permute.xlu0 %281
        %vm283 = vcmp.lt.s32.totalorder %v256, 2
        %v284 = vsel %vm283, %v280, %v282
        %v285 = vsel %vm283, %v282, %v280
        %vm286 = vcmp.ge.s32.totalorder %v254, 2
        %v287 = vsel %vm286, 1, 0
        %v288 = vlaneseq
        %v289 = vshrl.u32 %v288, 7
        %v290 = vsub.s32 0, %v289
        %v291 = vrot.slane %v287, %v290
        %v292 = vlaneseq
        %v293 = vshrl.u32 %v292, 7
        %v294 = vsub.s32 1, %v293
        %v295 = vrot.slane %v287, %v294
        %vm296 = vcmp.eq.s32.totalorder %v291, 1
        %vm297 = vcmp.eq.s32.totalorder %v295, 1
        %v298 = vsel %vm296, %v285, 0.0
        %v299 = vsel %vm297, %v284, 0.0
        %300 = vrot.lane.b32.xlu0 %v251, 1
        %v301 = vpop.permute.xlu0 %300
        %302 = vrot.lane.b32.xlu0 %v252, 1
        %v303 = vpop.permute.xlu0 %302
        %vm304 = vcmp.lt.s32.totalorder %v256, 1
        %v305 = vsel %vm304, %v301, %v303
        %v306 = vsel %vm304, %v303, %v301
        %vm307 = vcmp.ge.s32.totalorder %v254, 1
        %v308 = vsel %vm307, 1, 0
        %v309 = vlaneseq
        %v310 = vshrl.u32 %v309, 7
        %v311 = vsub.s32 0, %v310
        %v312 = vrot.slane %v308, %v311
        %v313 = vlaneseq
        %v314 = vshrl.u32 %v313, 7
        %v315 = vsub.s32 1, %v314
        %v316 = vrot.slane %v308, %v315
        %vm317 = vcmp.eq.s32.totalorder %v312, 1
        %vm318 = vcmp.eq.s32.totalorder %v316, 1
        %v319 = vsel %vm317, %v306, 0.0
        %v320 = vsel %vm318, %v305, 0.0
        %321 = vrot.lane.b32.xlu0 %v251, 127
        %v322 = vpop.permute.xlu0 %321
        %323 = vrot.lane.b32.xlu0 %v252, 127
        %v324 = vpop.permute.xlu0 %323
        %vm325 = vcmp.lt.s32.totalorder %v256, 127
        %v326 = vsel %vm325, %v322, %v324
        %v327 = vsel %vm325, %v324, %v322
        %vm328 = vcmp.lt.s32.totalorder %v254, 15
        %v329 = vsel %vm328, 1, 0
        %v330 = vlaneseq
        %v331 = vshrl.u32 %v330, 7
        %v332 = vsub.s32 0, %v331
        %v333 = vrot.slane %v329, %v332
        %v334 = vlaneseq
        %v335 = vshrl.u32 %v334, 7
        %v336 = vsub.s32 1, %v335
        %v337 = vrot.slane %v329, %v336
        %vm338 = vcmp.eq.s32.totalorder %v333, 1
        %vm339 = vcmp.eq.s32.totalorder %v337, 1
        %v340 = vsel %vm338, %v326, 0.0
        %v341 = vsel %vm339, %v327, 0.0
        %342 = vrot.lane.b32.xlu0 %v251, 126
        %v343 = vpop.permute.xlu0 %342
        %344 = vrot.lane.b32.xlu0 %v252, 126
        %v345 = vpop.permute.xlu0 %344
        %vm346 = vcmp.lt.s32.totalorder %v256, 126
        %v347 = vsel %vm346, %v343, %v345
        %v348 = vsel %vm346, %v345, %v343
        %vm349 = vcmp.lt.s32.totalorder %v254, 14
        %v350 = vsel %vm349, 1, 0
        %v351 = vlaneseq
        %v352 = vshrl.u32 %v351, 7
        %v353 = vsub.s32 0, %v352
        %v354 = vrot.slane %v350, %v353
        %v355 = vlaneseq
        %v356 = vshrl.u32 %v355, 7
        %v357 = vsub.s32 1, %v356
        %v358 = vrot.slane %v350, %v357
        %vm359 = vcmp.eq.s32.totalorder %v354, 1
        %vm360 = vcmp.eq.s32.totalorder %v358, 1
        %v361 = vsel %vm359, %v347, 0.0
        %v362 = vsel %vm360, %v348, 0.0
        %363 = vrot.lane.b32.xlu0 %v251, 125
        %v364 = vpop.permute.xlu0 %363
        %365 = vrot.lane.b32.xlu0 %v252, 125
        %v366 = vpop.permute.xlu0 %365
        %vm367 = vcmp.lt.s32.totalorder %v256, 125
        %v368 = vsel %vm367, %v364, %v366
        %v369 = vsel %vm367, %v366, %v364
        %vm370 = vcmp.lt.s32.totalorder %v254, 13
        %v371 = vsel %vm370, 1, 0
        %v372 = vlaneseq
        %v373 = vshrl.u32 %v372, 7
        %v374 = vsub.s32 0, %v373
        %v375 = vrot.slane %v371, %v374
        %v376 = vlaneseq
        %v377 = vshrl.u32 %v376, 7
        %v378 = vsub.s32 1, %v377
        %v379 = vrot.slane %v371, %v378
        %vm380 = vcmp.eq.s32.totalorder %v375, 1
        %vm381 = vcmp.eq.s32.totalorder %v379, 1
        %v382 = vsel %vm380, %v368, 0.0
        %v383 = vsel %vm381, %v369, 0.0
        %385 = vset.pattern.permute.xlu0 0
        %386 = vperm.xlu0 %385, %v253
        %v387 = vpop.permute.xlu0 %386
        %v389 = vmul.f32 %v277, %v387
        %v390 = vmul.f32 %v278, %v387
        %391 = vset.pattern.permute.xlu0 1
        %392 = vperm.xlu0 %391, %v253
        %v393 = vpop.permute.xlu0 %392
        %v395 = vmul.f32 %v298, %v393
        %v396 = vmul.f32 %v299, %v393
        %v397 = vadd.f32 %v389, %v395
        %v398 = vadd.f32 %v390, %v396
        %399 = vset.pattern.permute.xlu0 2
        %400 = vperm.xlu0 %399, %v253
        %v401 = vpop.permute.xlu0 %400
        %v403 = vmul.f32 %v319, %v401
        %v404 = vmul.f32 %v320, %v401
        %v405 = vadd.f32 %v397, %v403
        %v406 = vadd.f32 %v398, %v404
        %407 = vset.pattern.permute.xlu0 3
        %408 = vperm.xlu0 %407, %v253
        %v409 = vpop.permute.xlu0 %408
        %v411 = vmul.f32 %v251, %v409
        %v412 = vmul.f32 %v252, %v409
        %v413 = vadd.f32 %v405, %v411
        %v414 = vadd.f32 %v406, %v412
        %415 = vset.pattern.permute.xlu0 4
        %416 = vperm.xlu0 %415, %v253
        %v417 = vpop.permute.xlu0 %416
        %v419 = vmul.f32 %v340, %v417
        %v420 = vmul.f32 %v341, %v417
        %v421 = vadd.f32 %v413, %v419
        %v422 = vadd.f32 %v414, %v420
        %423 = vset.pattern.permute.xlu0 5
        %424 = vperm.xlu0 %423, %v253
        %v425 = vpop.permute.xlu0 %424
        %v427 = vmul.f32 %v361, %v425
        %v428 = vmul.f32 %v362, %v425
        %v429 = vadd.f32 %v421, %v427
        %v430 = vadd.f32 %v422, %v428
        %431 = vset.pattern.permute.xlu0 6
        %432 = vperm.xlu0 %431, %v253
        %v433 = vpop.permute.xlu0 %432
        %v435 = vmul.f32 %v382, %v433
        %v436 = vmul.f32 %v383, %v433
        %v437 = vadd.f32 %v429, %v435
        %v438 = vadd.f32 %v430, %v436
        %439 = vrot.lane.b32.xlu0 %v437, 48
        %v440 = vpop.permute.xlu0 %439
        %441 = vrot.lane.b32.xlu0 %v438, 48
        %v442 = vpop.permute.xlu0 %441
        %vm443 = vcmp.lt.s32.totalorder %v256, 48
        %v444 = vsel %vm443, %v440, %v442
        %v445 = vsel %vm443, %v442, %v440
        %vm446 = vcmp.ge.s32.totalorder %v256, 48
        %vm447 = vcmp.ge.s32.totalorder %v257, 48
        %v448 = vsel %vm446, 1, 0
        %v449 = vsel %vm447, 1, 0
        %vm450 = vcmp.eq.s32.totalorder %v448, 1
        %vm451 = vcmp.eq.s32.totalorder %v449, 1
        %v452 = vsel %vm450, %v445, 0.0
        %v453 = vsel %vm451, %v444, 0.0
        %v454 = vadd.f32 %v452, 0.0
        %v455 = vadd.f32 %v453, 0.0
        %456 = vset.pattern.permute.xlu0 7
        %457 = vperm.xlu0 %456, %v253
        %v458 = vpop.permute.xlu0 %457
        %v460 = vmul.f32 %v277, %v458
        %v461 = vmul.f32 %v278, %v458
        %462 = vset.pattern.permute.xlu0 8
        %463 = vperm.xlu0 %462, %v253
        %v464 = vpop.permute.xlu0 %463
        %v466 = vmul.f32 %v298, %v464
        %v467 = vmul.f32 %v299, %v464
        %v468 = vadd.f32 %v460, %v466
        %v469 = vadd.f32 %v461, %v467
        %470 = vset.pattern.permute.xlu0 9
        %471 = vperm.xlu0 %470, %v253
        %v472 = vpop.permute.xlu0 %471
        %v474 = vmul.f32 %v319, %v472
        %v475 = vmul.f32 %v320, %v472
        %v476 = vadd.f32 %v468, %v474
        %v477 = vadd.f32 %v469, %v475
        %478 = vset.pattern.permute.xlu0 10
        %479 = vperm.xlu0 %478, %v253
        %v480 = vpop.permute.xlu0 %479
        %v482 = vmul.f32 %v251, %v480
        %v483 = vmul.f32 %v252, %v480
        %v484 = vadd.f32 %v476, %v482
        %v485 = vadd.f32 %v477, %v483
        %486 = vset.pattern.permute.xlu0 11
        %487 = vperm.xlu0 %486, %v253
        %v488 = vpop.permute.xlu0 %487
        %v490 = vmul.f32 %v340, %v488
        %v491 = vmul.f32 %v341, %v488
        %v492 = vadd.f32 %v484, %v490
        %v493 = vadd.f32 %v485, %v491
        %494 = vset.pattern.permute.xlu0 12
        %495 = vperm.xlu0 %494, %v253
        %v496 = vpop.permute.xlu0 %495
        %v498 = vmul.f32 %v361, %v496
        %v499 = vmul.f32 %v362, %v496
        %v500 = vadd.f32 %v492, %v498
        %v501 = vadd.f32 %v493, %v499
        %502 = vset.pattern.permute.xlu0 13
        %503 = vperm.xlu0 %502, %v253
        %v504 = vpop.permute.xlu0 %503
        %v506 = vmul.f32 %v382, %v504
        %v507 = vmul.f32 %v383, %v504
        %v508 = vadd.f32 %v500, %v506
        %v509 = vadd.f32 %v501, %v507
        %510 = vrot.lane.b32.xlu0 %v508, 32
        %v511 = vpop.permute.xlu0 %510
        %512 = vrot.lane.b32.xlu0 %v509, 32
        %v513 = vpop.permute.xlu0 %512
        %vm514 = vcmp.lt.s32.totalorder %v256, 32
        %v515 = vsel %vm514, %v511, %v513
        %v516 = vsel %vm514, %v513, %v511
        %vm517 = vcmp.ge.s32.totalorder %v256, 32
        %vm518 = vcmp.ge.s32.totalorder %v257, 32
        %v519 = vsel %vm517, 1, 0
        %v520 = vsel %vm518, 1, 0
        %vm521 = vcmp.eq.s32.totalorder %v519, 1
        %vm522 = vcmp.eq.s32.totalorder %v520, 1
        %v523 = vsel %vm521, %v516, 0.0
        %v524 = vsel %vm522, %v515, 0.0
        %v525 = vadd.f32 %v454, %v523
        %v526 = vadd.f32 %v455, %v524
        %527 = vset.pattern.permute.xlu0 14
        %528 = vperm.xlu0 %527, %v253
        %v529 = vpop.permute.xlu0 %528
        %v531 = vmul.f32 %v277, %v529
        %v532 = vmul.f32 %v278, %v529
        %533 = vset.pattern.permute.xlu0 15
        %534 = vperm.xlu0 %533, %v253
        %v535 = vpop.permute.xlu0 %534
        %v537 = vmul.f32 %v298, %v535
        %v538 = vmul.f32 %v299, %v535
        %v539 = vadd.f32 %v531, %v537
        %v540 = vadd.f32 %v532, %v538
        %541 = vset.pattern.permute.xlu0 16
        %542 = vperm.xlu0 %541, %v253
        %v543 = vpop.permute.xlu0 %542
        %v545 = vmul.f32 %v319, %v543
        %v546 = vmul.f32 %v320, %v543
        %v547 = vadd.f32 %v539, %v545
        %v548 = vadd.f32 %v540, %v546
        %549 = vset.pattern.permute.xlu0 17
        %550 = vperm.xlu0 %549, %v253
        %v551 = vpop.permute.xlu0 %550
        %v553 = vmul.f32 %v251, %v551
        %v554 = vmul.f32 %v252, %v551
        %v555 = vadd.f32 %v547, %v553
        %v556 = vadd.f32 %v548, %v554
        %557 = vset.pattern.permute.xlu0 18
        %558 = vperm.xlu0 %557, %v253
        %v559 = vpop.permute.xlu0 %558
        %v561 = vmul.f32 %v340, %v559
        %v562 = vmul.f32 %v341, %v559
        %v563 = vadd.f32 %v555, %v561
        %v564 = vadd.f32 %v556, %v562
        %565 = vset.pattern.permute.xlu0 19
        %566 = vperm.xlu0 %565, %v253
        %v567 = vpop.permute.xlu0 %566
        %v569 = vmul.f32 %v361, %v567
        %v570 = vmul.f32 %v362, %v567
        %v571 = vadd.f32 %v563, %v569
        %v572 = vadd.f32 %v564, %v570
        %573 = vset.pattern.permute.xlu0 20
        %574 = vperm.xlu0 %573, %v253
        %v575 = vpop.permute.xlu0 %574
        %v577 = vmul.f32 %v382, %v575
        %v578 = vmul.f32 %v383, %v575
        %v579 = vadd.f32 %v571, %v577
        %v580 = vadd.f32 %v572, %v578
        %581 = vrot.lane.b32.xlu0 %v579, 16
        %v582 = vpop.permute.xlu0 %581
        %583 = vrot.lane.b32.xlu0 %v580, 16
        %v584 = vpop.permute.xlu0 %583
        %vm585 = vcmp.lt.s32.totalorder %v256, 16
        %v586 = vsel %vm585, %v582, %v584
        %v587 = vsel %vm585, %v584, %v582
        %vm588 = vcmp.ge.s32.totalorder %v256, 16
        %vm589 = vcmp.ge.s32.totalorder %v257, 16
        %v590 = vsel %vm588, 1, 0
        %v591 = vsel %vm589, 1, 0
        %vm592 = vcmp.eq.s32.totalorder %v590, 1
        %vm593 = vcmp.eq.s32.totalorder %v591, 1
        %v594 = vsel %vm592, %v587, 0.0
        %v595 = vsel %vm593, %v586, 0.0
        %v596 = vadd.f32 %v525, %v594
        %v597 = vadd.f32 %v526, %v595
        %598 = vset.pattern.permute.xlu0 21
        %599 = vperm.xlu0 %598, %v253
        %v600 = vpop.permute.xlu0 %599
        %v602 = vmul.f32 %v277, %v600
        %v603 = vmul.f32 %v278, %v600
        %604 = vset.pattern.permute.xlu0 22
        %605 = vperm.xlu0 %604, %v253
        %v606 = vpop.permute.xlu0 %605
        %v608 = vmul.f32 %v298, %v606
        %v609 = vmul.f32 %v299, %v606
        %v610 = vadd.f32 %v602, %v608
        %v611 = vadd.f32 %v603, %v609
        %612 = vset.pattern.permute.xlu0 23
        %613 = vperm.xlu0 %612, %v253
        %v614 = vpop.permute.xlu0 %613
        %v616 = vmul.f32 %v319, %v614
        %v617 = vmul.f32 %v320, %v614
        %v618 = vadd.f32 %v610, %v616
        %v619 = vadd.f32 %v611, %v617
        %620 = vset.pattern.permute.xlu0 24
        %621 = vperm.xlu0 %620, %v253
        %v622 = vpop.permute.xlu0 %621
        %v624 = vmul.f32 %v251, %v622
        %v625 = vmul.f32 %v252, %v622
        %v626 = vadd.f32 %v618, %v624
        %v627 = vadd.f32 %v619, %v625
        %628 = vset.pattern.permute.xlu0 25
        %629 = vperm.xlu0 %628, %v253
        %v630 = vpop.permute.xlu0 %629
        %v632 = vmul.f32 %v340, %v630
        %v633 = vmul.f32 %v341, %v630
        %v634 = vadd.f32 %v626, %v632
        %v635 = vadd.f32 %v627, %v633
        %636 = vset.pattern.permute.xlu0 26
        %637 = vperm.xlu0 %636, %v253
        %v638 = vpop.permute.xlu0 %637
        %v640 = vmul.f32 %v361, %v638
        %v641 = vmul.f32 %v362, %v638
        %v642 = vadd.f32 %v634, %v640
        %v643 = vadd.f32 %v635, %v641
        %644 = vset.pattern.permute.xlu0 27
        %645 = vperm.xlu0 %644, %v253
        %v646 = vpop.permute.xlu0 %645
        %v648 = vmul.f32 %v382, %v646
        %v649 = vmul.f32 %v383, %v646
        %v650 = vadd.f32 %v642, %v648
        %v651 = vadd.f32 %v643, %v649
        %v652 = vadd.f32 %v596, %v650
        %v653 = vadd.f32 %v597, %v651
        %654 = vset.pattern.permute.xlu0 28
        %655 = vperm.xlu0 %654, %v253
        %v656 = vpop.permute.xlu0 %655
        %v658 = vmul.f32 %v277, %v656
        %v659 = vmul.f32 %v278, %v656
        %660 = vset.pattern.permute.xlu0 29
        %661 = vperm.xlu0 %660, %v253
        %v662 = vpop.permute.xlu0 %661
        %v664 = vmul.f32 %v298, %v662
        %v665 = vmul.f32 %v299, %v662
        %v666 = vadd.f32 %v658, %v664
        %v667 = vadd.f32 %v659, %v665
        %668 = vset.pattern.permute.xlu0 30
        %669 = vperm.xlu0 %668, %v253
        %v670 = vpop.permute.xlu0 %669
        %v672 = vmul.f32 %v319, %v670
        %v673 = vmul.f32 %v320, %v670
        %v674 = vadd.f32 %v666, %v672
        %v675 = vadd.f32 %v667, %v673
        %676 = vset.pattern.permute.xlu0 31
        %677 = vperm.xlu0 %676, %v253
        %v678 = vpop.permute.xlu0 %677
        %v680 = vmul.f32 %v251, %v678
        %v681 = vmul.f32 %v252, %v678
        %v682 = vadd.f32 %v674, %v680
        %v683 = vadd.f32 %v675, %v681
        %684 = vset.pattern.permute.xlu0 32
        %685 = vperm.xlu0 %684, %v253
        %v686 = vpop.permute.xlu0 %685
        %v688 = vmul.f32 %v340, %v686
        %v689 = vmul.f32 %v341, %v686
        %v690 = vadd.f32 %v682, %v688
        %v691 = vadd.f32 %v683, %v689
        %692 = vset.pattern.permute.xlu0 33
        %693 = vperm.xlu0 %692, %v253
        %v694 = vpop.permute.xlu0 %693
        %v696 = vmul.f32 %v361, %v694
        %v697 = vmul.f32 %v362, %v694
        %v698 = vadd.f32 %v690, %v696
        %v699 = vadd.f32 %v691, %v697
        %700 = vset.pattern.permute.xlu0 34
        %701 = vperm.xlu0 %700, %v253
        %v702 = vpop.permute.xlu0 %701
        %v704 = vmul.f32 %v382, %v702
        %v705 = vmul.f32 %v383, %v702
        %v706 = vadd.f32 %v698, %v704
        %v707 = vadd.f32 %v699, %v705
        %708 = vrot.lane.b32.xlu0 %v706, 112
        %v709 = vpop.permute.xlu0 %708
        %710 = vrot.lane.b32.xlu0 %v707, 112
        %v711 = vpop.permute.xlu0 %710
        %vm712 = vcmp.lt.s32.totalorder %v256, 112
        %v713 = vsel %vm712, %v709, %v711
        %v714 = vsel %vm712, %v711, %v709
        %vm715 = vcmp.lt.s32.totalorder %v256, 240
        %vm716 = vcmp.lt.s32.totalorder %v257, 240
        %v717 = vsel %vm715, 1, 0
        %v718 = vsel %vm716, 1, 0
        %vm719 = vcmp.eq.s32.totalorder %v717, 1
        %vm720 = vcmp.eq.s32.totalorder %v718, 1
        %v721 = vsel %vm719, %v713, 0.0
        %v722 = vsel %vm720, %v714, 0.0
        %v723 = vadd.f32 %v652, %v721
        %v724 = vadd.f32 %v653, %v722
        %725 = vset.pattern.permute.xlu0 35
        %726 = vperm.xlu0 %725, %v253
        %v727 = vpop.permute.xlu0 %726
        %v729 = vmul.f32 %v277, %v727
        %v730 = vmul.f32 %v278, %v727
        %731 = vset.pattern.permute.xlu0 36
        %732 = vperm.xlu0 %731, %v253
        %v733 = vpop.permute.xlu0 %732
        %v735 = vmul.f32 %v298, %v733
        %v736 = vmul.f32 %v299, %v733
        %v737 = vadd.f32 %v729, %v735
        %v738 = vadd.f32 %v730, %v736
        %739 = vset.pattern.permute.xlu0 37
        %740 = vperm.xlu0 %739, %v253
        %v741 = vpop.permute.xlu0 %740
        %v743 = vmul.f32 %v319, %v741
        %v744 = vmul.f32 %v320, %v741
        %v745 = vadd.f32 %v737, %v743
        %v746 = vadd.f32 %v738, %v744
        %747 = vset.pattern.permute.xlu0 38
        %748 = vperm.xlu0 %747, %v253
        %v749 = vpop.permute.xlu0 %748
        %v751 = vmul.f32 %v251, %v749
        %v752 = vmul.f32 %v252, %v749
        %v753 = vadd.f32 %v745, %v751
        %v754 = vadd.f32 %v746, %v752
        %755 = vset.pattern.permute.xlu0 39
        %756 = vperm.xlu0 %755, %v253
        %v757 = vpop.permute.xlu0 %756
        %v759 = vmul.f32 %v340, %v757
        %v760 = vmul.f32 %v341, %v757
        %v761 = vadd.f32 %v753, %v759
        %v762 = vadd.f32 %v754, %v760
        %763 = vset.pattern.permute.xlu0 40
        %764 = vperm.xlu0 %763, %v253
        %v765 = vpop.permute.xlu0 %764
        %v767 = vmul.f32 %v361, %v765
        %v768 = vmul.f32 %v362, %v765
        %v769 = vadd.f32 %v761, %v767
        %v770 = vadd.f32 %v762, %v768
        %771 = vset.pattern.permute.xlu0 41
        %772 = vperm.xlu0 %771, %v253
        %v773 = vpop.permute.xlu0 %772
        %v775 = vmul.f32 %v382, %v773
        %v776 = vmul.f32 %v383, %v773
        %v777 = vadd.f32 %v769, %v775
        %v778 = vadd.f32 %v770, %v776
        %779 = vrot.lane.b32.xlu0 %v777, 96
        %v780 = vpop.permute.xlu0 %779
        %781 = vrot.lane.b32.xlu0 %v778, 96
        %v782 = vpop.permute.xlu0 %781
        %vm783 = vcmp.lt.s32.totalorder %v256, 96
        %v784 = vsel %vm783, %v780, %v782
        %v785 = vsel %vm783, %v782, %v780
        %vm786 = vcmp.lt.s32.totalorder %v256, 224
        %vm787 = vcmp.lt.s32.totalorder %v257, 224
        %v788 = vsel %vm786, 1, 0
        %v789 = vsel %vm787, 1, 0
        %vm790 = vcmp.eq.s32.totalorder %v788, 1
        %vm791 = vcmp.eq.s32.totalorder %v789, 1
        %v792 = vsel %vm790, %v784, 0.0
        %v793 = vsel %vm791, %v785, 0.0
        %v794 = vadd.f32 %v723, %v792
        %v795 = vadd.f32 %v724, %v793
        %796 = vset.pattern.permute.xlu0 42
        %797 = vperm.xlu0 %796, %v253
        %v798 = vpop.permute.xlu0 %797
        %v800 = vmul.f32 %v277, %v798
        %v801 = vmul.f32 %v278, %v798
        %802 = vset.pattern.permute.xlu0 43
        %803 = vperm.xlu0 %802, %v253
        %v804 = vpop.permute.xlu0 %803
        %v806 = vmul.f32 %v298, %v804
        %v807 = vmul.f32 %v299, %v804
        %v808 = vadd.f32 %v800, %v806
        %v809 = vadd.f32 %v801, %v807
        %810 = vset.pattern.permute.xlu0 44
        %811 = vperm.xlu0 %810, %v253
        %v812 = vpop.permute.xlu0 %811
        %v814 = vmul.f32 %v319, %v812
        %v815 = vmul.f32 %v320, %v812
        %v816 = vadd.f32 %v808, %v814
        %v817 = vadd.f32 %v809, %v815
        %818 = vset.pattern.permute.xlu0 45
        %819 = vperm.xlu0 %818, %v253
        %v820 = vpop.permute.xlu0 %819
        %v822 = vmul.f32 %v251, %v820
        %v823 = vmul.f32 %v252, %v820
        %v824 = vadd.f32 %v816, %v822
        %v825 = vadd.f32 %v817, %v823
        %826 = vset.pattern.permute.xlu0 46
        %827 = vperm.xlu0 %826, %v253
        %v828 = vpop.permute.xlu0 %827
        %v830 = vmul.f32 %v340, %v828
        %v831 = vmul.f32 %v341, %v828
        %v832 = vadd.f32 %v824, %v830
        %v833 = vadd.f32 %v825, %v831
        %834 = vset.pattern.permute.xlu0 47
        %835 = vperm.xlu0 %834, %v253
        %v836 = vpop.permute.xlu0 %835
        %v838 = vmul.f32 %v361, %v836
        %v839 = vmul.f32 %v362, %v836
        %v840 = vadd.f32 %v832, %v838
        %v841 = vadd.f32 %v833, %v839
        %842 = vset.pattern.permute.xlu0 48
        %843 = vperm.xlu0 %842, %v253
        %v844 = vpop.permute.xlu0 %843
        %v846 = vmul.f32 %v382, %v844
        %v847 = vmul.f32 %v383, %v844
        %v848 = vadd.f32 %v840, %v846
        %v849 = vadd.f32 %v841, %v847
        %850 = vrot.lane.b32.xlu0 %v848, 80
        %v851 = vpop.permute.xlu0 %850
        %852 = vrot.lane.b32.xlu0 %v849, 80
        %v853 = vpop.permute.xlu0 %852
        %vm854 = vcmp.lt.s32.totalorder %v256, 80
        %v855 = vsel %vm854, %v851, %v853
        %v856 = vsel %vm854, %v853, %v851
        %vm857 = vcmp.lt.s32.totalorder %v256, 208
        %vm858 = vcmp.lt.s32.totalorder %v257, 208
        %v859 = vsel %vm857, 1, 0
        %v860 = vsel %vm858, 1, 0
        %vm861 = vcmp.eq.s32.totalorder %v859, 1
        %vm862 = vcmp.eq.s32.totalorder %v860, 1
        %v863 = vsel %vm861, %v855, 0.0
        %v864 = vsel %vm862, %v856, 0.0
        %v865 = vadd.f32 %v794, %v863
        %v866 = vadd.f32 %v795, %v864
        %vm867 = vcmask 1041408
        %v868 = vsel %vm867, %v865, 0.0
        %v869 = vrot.slane %v868, 4
        %v870 = vadd.f32 %v868, %v869
        %v871 = vrot.slane %v870, 2
        %v872 = vadd.f32 %v870, %v871
        %v873 = vrot.slane %v872, 1
        %v874 = vadd.f32 %v872, %v873
        %v875 = vsel %vm867, %v866, 0.0
        %v876 = vrot.slane %v875, 4
        %v877 = vadd.f32 %v875, %v876
        %v878 = vrot.slane %v877, 2
        %v879 = vadd.f32 %v877, %v878
        %v880 = vrot.slane %v879, 1
        %v881 = vadd.f32 %v879, %v880
        %s882 = sld [smem:[#allocation2]]
        %v883 = vstv %s882
        %v884 = vadd.f32 %v874, %v883
        %v885 = vadd.f32 %v881, %v883
        %v886 = vmul.f32 %v884, 0.5
        %v887 = vmul.f32 %v885, 0.5
        %v888 = vtanh.pop %v886
        %v889 = vtanh.pop %v887
        %v890 = vadd.f32 %v888, 1.0
        %v891 = vadd.f32 %v889, 1.0
        %v892 = vmul.f32 %v890, 0.5
        %v893 = vmul.f32 %v891, 0.5
        %v896 = vcombine.low %v892, %v893
        %v898 = vmul.f32 %v215, %v896
        %899 = vst [vmem:[%s214] sm:$0xff] %v898
        %s900 = sand.u32 %s119, 1
        %s901 = scalar_lea.sflag [#allocation5], %s900
        %s902 = sand.u32 %s119, 1
        %s903 = smul.addr %s902, 8
        %s904 = scalar_lea.vmem [#allocation6], %s903
        // Predicated region
        $region41: #{tpu_custom_call.1} parent=35 // pred_check
          %p905 = pneg %p129
        $region42: #{tpu_custom_call.1} parent=35 // pred_check_branch
          %907 = sbr.rel (%p905) target = $region44
        $region43: #{tpu_custom_call.1} parent=35 // pred_region
          %s909 = ssub.s32 128, 128
          %910 = vsyncadd %s901, %s909
          %s911 = smul.addr %s22, 2
          %s912 = smul.addr %s911, 64
          %s913 = scalar_lea.hbm %s4, %s912
          %s915 = sshll.u32 %s904, 4
          %s916 = int_to_ptr.vmem [resolvable:$true] %s915
          %918 = dma.vmem_to_hbm [thread:$0]  %s916, 128, %s913, %s901
        $region44: #{tpu_custom_call.1} parent=35 // pred_fallthru
          _
      $region36: #{tpu_custom_call.1} parent=5 // pred_fallthru
        _
      %p919 = scmp.le.s32.totalorder 2, %s17
      // Predicated region
      $region45: #{tpu_custom_call.1} parent=5 // pred_check
        %p920 = pneg %p919
      $region46: #{tpu_custom_call.1} parent=5 // pred_check_branch
        %922 = sbr.rel (%p920) target = $region48
      $region47: #{tpu_custom_call.1} parent=5 // pred_region
        %s923 = ssub.s32 %s17, 2
        // Predicated region
        $region49: #{tpu_custom_call.1} parent=47 // pred_check
          %p924 = pneg %p135
        $region50: #{tpu_custom_call.1} parent=47 // pred_check_branch
          %926 = sbr.rel (%p924) target = $region52
        $region51: #{tpu_custom_call.1} parent=47 // pred_region
          %s927 = sand.u32 %s120, 1
          %s928 = scalar_lea.sflag [#allocation5], %s927
          %s929 = sand.u32 %s120, 1
          %s930 = smul.addr %s929, 8
          %s931 = scalar_lea.vmem [#allocation6], %s930
          %932 = dma.done %s928, 128
        $region52: #{tpu_custom_call.1} parent=47 // pred_fallthru
          _
      $region48: #{tpu_custom_call.1} parent=5 // pred_fallthru
        _
    $region6: #{tpu_custom_call.1} parent=1 // loop_footer
      %s21 = sadd.s32 1, %s17
    $region7: #{tpu_custom_call.1} parent=1 // loop_footer_branch
      %16 = sbr.rel target = $region3
    $region8: #{tpu_custom_call.1} parent=1 // loop_exit
      _
    %933 = vsyncpa [#allocation4], 1
    %s934 = scalar_lea.sflag [#allocation4], 1
    %935 = vsyncpa %s934, 1
    %936 = vsyncpa [#allocation5], 1
    %s937 = scalar_lea.sflag [#allocation5], 1
    %938 = vsyncpa %s937, 1

</llo_original>
